<compile_context>
chip_gen: v7x
topology: tpu7x:2x2x1
jax: 0.10.0
libtpu: 0.0.40
codegen_flags: <defaults>
</compile_context>

<pallas_src>
import jax
import jax.numpy as jnp
from jax.experimental import pallas as pl
from jax.experimental.pallas import tpu as pltpu

_EPS = 1e-6
_LANES = 128
_ROWS_PER_CHUNK = 128      # rows per inner compute chunk (bounds live vregs)
_MAX_ROWS_PER_TILE = 2048  # rows per DMA block: (3, 2048, 128) f32 = 3 MiB


def _cdiv(a, b):
    return -(-a // b)


def _choose_rows_per_tile(rows, batch):
    """Rows per DMA block: multiple of _ROWS_PER_CHUNK (or == rows if tiny)."""
    if rows <= _ROWS_PER_CHUNK:
        return rows
    r = min(_MAX_ROWS_PER_TILE, (rows // _ROWS_PER_CHUNK) * _ROWS_PER_CHUNK)
    if batch == 1:
        # keep at least 2 grid steps so both v7x TensorCores get work
        half = ((rows // 2) // _ROWS_PER_CHUNK) * _ROWS_PER_CHUNK
        r = min(r, max(_ROWS_PER_CHUNK, half))
    return r


def _process_chunk(sat, x_ref, o_ref, row0, n_rows):
    """Fused rgb->hsv, saturation scale+clamp, hsv->rgb on an (n_rows,128) slab."""
    sl = pl.ds(row0, n_rows)
    r = x_ref[0, sl, :].astype(jnp.float32)
    g = x_ref[1, sl, :].astype(jnp.float32)
    b = x_ref[2, sl, :].astype(jnp.float32)

    # ---- rgb -> (hue in sextants, s, v)   (kornia rgb_to_hsv semantics) ----
    v = jnp.maximum(jnp.maximum(r, g), b)
    minc = jnp.minimum(jnp.minimum(r, g), b)
    deltac = v - minc
    s = deltac / (v + _EPS)                        # exact divide (parity w/ kornia)
    dsafe = jnp.where(deltac == 0.0, 1.0, deltac)

    rc = v - r
    gc = v - g
    bc = v - b
    h = jnp.where(r == v, bc - gc,
        jnp.where(g == v, 2.0 * dsafe + rc - bc,
                          4.0 * dsafe + gc - rc))
    h = h / dsafe                                  # exact divide; h in [-1, 5]
    h6 = h - 6.0 * jnp.floor(h * (1.0 / 6.0))      # mod 6 -> [0, 6]

    # ---- adjust saturation ----
    s = jnp.clip(s * sat, 0.0, 1.0)
    vs = v * s

    # ---- hsv -> rgb (branch-free; identical to kornia's sextant table) ----
    def channel(n):
        k = n + h6
        k = jnp.where(k < 6.0, k, k - 6.0)
        w = jnp.clip(jnp.minimum(k, 4.0 - k), 0.0, 1.0)
        return (v - vs * w).astype(o_ref.dtype)

    o_ref[0, sl, :] = channel(5.0)
    o_ref[1, sl, :] = channel(3.0)
    o_ref[2, sl, :] = channel(1.0)


def _make_kernel(rows_per_block, chunk_rows):
    n_chunks = rows_per_block // chunk_rows
    assert n_chunks * chunk_rows == rows_per_block

    def kernel(sat_ref, x_ref, o_ref):
        # sat_ref: SMEM (B,) scalar-prefetch; x_ref/o_ref: VMEM (3, R, 128)
        sat = sat_ref[pl.program_id(0)]
        if n_chunks == 1:
            _process_chunk(sat, x_ref, o_ref, 0, chunk_rows)
        else:
            def body(c, carry):
                row0 = pl.multiple_of(c * chunk_rows, chunk_rows)
                _process_chunk(sat, x_ref, o_ref, row0, chunk_rows)
                return carry
            jax.lax.fori_loop(0, n_chunks, body, 0, unroll=False)

    return kernel


def adjust_saturation(x, saturation_factor):
    """x: (*, 3, H, W) RGB in [0, 1]. saturation_factor: float or (B,) array."""
    orig_shape = x.shape
    assert x.ndim >= 3 and x.shape[-3] == 3, "expected (*, 3, H, W)"
    H, W = x.shape[-2], x.shape[-1]
    B = 1
    for d in orig_shape[:-3]:
        B *= d
    B = max(B, 1)

    sat = jnp.asarray(saturation_factor, dtype=jnp.float32).reshape(-1)
    if sat.shape[0] == 1:
        sat = jnp.broadcast_to(sat, (B,))
    assert sat.shape[0] == B

    hw = H * W
    rows = _cdiv(hw, _LANES)
    hw_p = rows * _LANES
    R = _choose_rows_per_tile(rows, B)
    chunk = min(R, _ROWS_PER_CHUNK)
    n_tiles = _cdiv(rows, R)

    xf = x.reshape(B, 3, hw)
    if hw_p != hw:
        # only pad to the next lane multiple; the ragged row-tile is handled by
        # Pallas block masking, so there is no full-tile pad / slice roundtrip.
        xf = jnp.pad(xf, ((0, 0), (0, 0), (0, hw_p - hw)))
    xr = xf.reshape(B, 3, rows, _LANES)

    grid_spec = pltpu.PrefetchScalarGridSpec(
        num_scalar_prefetch=1,
        grid=(B, n_tiles),
        in_specs=[
            pl.BlockSpec((None, 3, R, _LANES), lambda b, t, sat_ref: (b, 0, t, 0))
        ],
        out_specs=pl.BlockSpec(
            (None, 3, R, _LANES), lambda b, t, sat_ref: (b, 0, t, 0)
        ),
    )

    out_r = pl.pallas_call(
        _make_kernel(R, chunk),
        out_shape=jax.ShapeDtypeStruct((B, 3, rows, _LANES), x.dtype),
        grid_spec=grid_spec,
        compiler_params=pltpu.CompilerParams(
            dimension_semantics=("parallel", "parallel"),
            vmem_limit_bytes=32 * 1024 * 1024,
        ),
    )(sat, xr)

    out = out_r.reshape(B, 3, hw_p)
    if hw_p != hw:
        out = out[:, :, :hw]
    return out.reshape(orig_shape)


class AdjustSaturation:
    """JAX/Pallas port of kornia.enhance.AdjustSaturation."""

    def __init__(self, saturation_factor):
        self.saturation_factor = saturation_factor

    def __call__(self, x):
        return adjust_saturation(x, self.saturation_factor)


def _reference(x, saturation_factor):
    """Pure-jnp kornia-semantics reference (exact divides, 2*pi roundtrip)."""
    import math
    two_pi = 2.0 * math.pi
    B = x.shape[0]
    sat = jnp.broadcast_to(jnp.asarray(saturation_factor, x.dtype).reshape(-1), (B,))
    sat = sat[:, None, None]
    r, g, bl = x[:, 0], x[:, 1], x[:, 2]
    maxc = jnp.maximum(jnp.maximum(r, g), bl)
    minc = jnp.minimum(jnp.minimum(r, g), bl)
    v = maxc
    deltac = maxc - minc
    s = deltac / (v + _EPS)
    dsafe = jnp.where(deltac == 0, 1.0, deltac)
    rc, gc, bc = maxc - r, maxc - g, maxc - bl
    h0, h1, h2 = bc - gc, 2 * dsafe + rc - bc, 4 * dsafe + gc - rc
    h = jnp.where(r == maxc, h0, jnp.where(g == maxc, h1, h2)) / dsafe
    h = ((h / 6.0) % 1.0) * two_pi
    s = jnp.clip(s * sat, 0.0, 1.0)
    h6 = (h / two_pi) * 6.0
    hi = jnp.floor(h6) % 6.0
    f = (h6 % 6.0) - hi
    p, q, t = v * (1 - s), v * (1 - f * s), v * (1 - (1 - f) * s)
    hi_i = hi.astype(jnp.int32)

    def sel6(c0, c1, c2, c3, c4, c5):
        return jnp.where(hi_i == 0, c0, jnp.where(hi_i == 1, c1, jnp.where(
            hi_i == 2, c2, jnp.where(hi_i == 3, c3, jnp.where(hi_i == 4, c4, c5)))))

    return jnp.stack([sel6(v, q, p, p, t, v),
                      sel6(t, v, v, q, p, p),
                      sel6(p, p, t, v, v, q)], axis=1)


if __name__ == "__main__":
    k0, k1, k2 = jax.random.split(jax.random.PRNGKey(0), 3)

    # primary case: per-batch factors, lane-aligned spatial size
    B, H, W = 2, 16, 16
    x = jax.random.uniform(k0, (B, 3, H, W), dtype=jnp.float32)   # RGB in [0, 1]
    sat = jnp.array([1.0, 2.0], dtype=jnp.float32)                # per-batch factor

    module = AdjustSaturation(sat)
    out = jax.block_until_ready(module(x))
    ref = _reference(x, sat)
    assert out.shape == x.shape and out.dtype == x.dtype
    assert float(jnp.max(jnp.abs(out - ref))) < 1e-3

    # factor 1.0 is (numerically) the identity
    out_id = jax.block_until_ready(adjust_saturation(x, 1.0))
    assert float(jnp.max(jnp.abs(out_id - x))) < 1e-3

    # H*W not a multiple of 128 -> exercises the small lane-pad path
    x2 = jax.random.uniform(k1, (1, 3, 5, 7), dtype=jnp.float32)
    out2 = jax.block_until_ready(adjust_saturation(x2, 0.5))
    assert float(jnp.max(jnp.abs(out2 - _reference(x2, 0.5)))) < 1e-3

    # multi-tile grid + ragged last row-tile + in-kernel strip-mining loop
    x3 = jax.random.uniform(k2, (2, 3, 192, 192), dtype=jnp.float32)
    sat3 = jnp.array([0.3, 1.7], dtype=jnp.float32)
    out3 = jax.block_until_ready(adjust_saturation(x3, sat3))
    assert float(jnp.max(jnp.abs(out3 - _reference(x3, sat3)))) < 1e-3

    print("KERNEL_OK")
</pallas_src>

<mosaic_0001>
module attributes {stable_mosaic.version = 11 : i64} {
  func.func @kernel(%arg0: i32, %arg1: i32, %arg2: memref<2xf32, #tpu.memory_space<smem>>, %arg3: memref<1x3x2x128xf32, #tpu.memory_space<vmem>>, %arg4: memref<1x3x2x128xf32, #tpu.memory_space<vmem>>) attributes {dimension_semantics = [#tpu.dimension_semantics<parallel>, #tpu.dimension_semantics<parallel>], iteration_bounds = array<i64: 2, 1>, scalar_prefetch = 1 : i64, scratch_operands = 0 : i64, tpu.core_type = #tpu.core_type<tc>, window_params = [{transform_indices = @transform_0, window_bounds = array<i64: 1, 3, 2, 128>}, {transform_indices = @transform_1, window_bounds = array<i64: 1, 3, 2, 128>}]} {
    %0 = arith.index_cast %arg0 : i32 to index
    %1 = memref.load %arg2[%0] : memref<2xf32, #tpu.memory_space<smem>>
    %c0 = arith.constant 0 : index
    %c0_0 = arith.constant 0 : index
    %c0_1 = arith.constant 0 : index
    %c0_2 = arith.constant 0 : index
    %2 = vector.load %arg3[%c0, %c0_0, %c0_1, %c0_2] : memref<1x3x2x128xf32, #tpu.memory_space<vmem>>, vector<1x1x2x128xf32>
    %3 = vector.shape_cast %2 : vector<1x1x2x128xf32> to vector<2x128xf32>
    %c0_3 = arith.constant 0 : index
    %c1 = arith.constant 1 : index
    %c0_4 = arith.constant 0 : index
    %c0_5 = arith.constant 0 : index
    %4 = vector.load %arg3[%c0_3, %c1, %c0_4, %c0_5] : memref<1x3x2x128xf32, #tpu.memory_space<vmem>>, vector<1x1x2x128xf32>
    %5 = vector.shape_cast %4 : vector<1x1x2x128xf32> to vector<2x128xf32>
    %c0_6 = arith.constant 0 : index
    %c2 = arith.constant 2 : index
    %c0_7 = arith.constant 0 : index
    %c0_8 = arith.constant 0 : index
    %6 = vector.load %arg3[%c0_6, %c2, %c0_7, %c0_8] : memref<1x3x2x128xf32, #tpu.memory_space<vmem>>, vector<1x1x2x128xf32>
    %7 = vector.shape_cast %6 : vector<1x1x2x128xf32> to vector<2x128xf32>
    %8 = arith.maximumf %3, %5 : vector<2x128xf32>
    %9 = arith.maximumf %8, %7 : vector<2x128xf32>
    %10 = arith.minimumf %3, %5 : vector<2x128xf32>
    %11 = arith.minimumf %10, %7 : vector<2x128xf32>
    %12 = arith.subf %9, %11 : vector<2x128xf32>
    %cst = arith.constant 9.99999997E-7 : f32
    %13 = vector.broadcast %cst : f32 to vector<2x128xf32>
    %14 = arith.addf %9, %13 : vector<2x128xf32>
    %15 = arith.divf %12, %14 : vector<2x128xf32>
    %cst_9 = arith.constant 0.000000e+00 : f32
    %16 = vector.broadcast %cst_9 : f32 to vector<2x128xf32>
    %17 = arith.cmpf oeq, %12, %16 : vector<2x128xf32>
    %cst_10 = arith.constant 1.000000e+00 : f32
    %18 = vector.broadcast %cst_10 : f32 to vector<2x128xf32>
    %19 = arith.select %17, %18, %12 : vector<2x128xi1>, vector<2x128xf32>
    %20 = arith.subf %9, %3 : vector<2x128xf32>
    %21 = arith.subf %9, %5 : vector<2x128xf32>
    %22 = arith.subf %9, %7 : vector<2x128xf32>
    %23 = arith.cmpf oeq, %3, %9 : vector<2x128xf32>
    %24 = arith.subf %22, %21 : vector<2x128xf32>
    %25 = arith.cmpf oeq, %5, %9 : vector<2x128xf32>
    %cst_11 = arith.constant 2.000000e+00 : f32
    %26 = vector.broadcast %cst_11 : f32 to vector<2x128xf32>
    %27 = arith.mulf %26, %19 : vector<2x128xf32>
    %28 = arith.addf %27, %20 : vector<2x128xf32>
    %29 = arith.subf %28, %22 : vector<2x128xf32>
    %cst_12 = arith.constant 4.000000e+00 : f32
    %30 = vector.broadcast %cst_12 : f32 to vector<2x128xf32>
    %31 = arith.mulf %30, %19 : vector<2x128xf32>
    %32 = arith.addf %31, %21 : vector<2x128xf32>
    %33 = arith.subf %32, %20 : vector<2x128xf32>
    %34 = arith.select %25, %29, %33 : vector<2x128xi1>, vector<2x128xf32>
    %35 = arith.select %23, %24, %34 : vector<2x128xi1>, vector<2x128xf32>
    %36 = arith.divf %35, %19 : vector<2x128xf32>
    %cst_13 = arith.constant 0.166666672 : f32
    %37 = vector.broadcast %cst_13 : f32 to vector<2x128xf32>
    %38 = arith.mulf %36, %37 : vector<2x128xf32>
    %39 = math.floor %38 : vector<2x128xf32>
    %cst_14 = arith.constant 6.000000e+00 : f32
    %40 = vector.broadcast %cst_14 : f32 to vector<2x128xf32>
    %41 = arith.mulf %40, %39 : vector<2x128xf32>
    %42 = arith.subf %36, %41 : vector<2x128xf32>
    %43 = vector.broadcast %1 : f32 to vector<2x128xf32>
    %44 = arith.mulf %15, %43 : vector<2x128xf32>
    %cst_15 = arith.constant 0.000000e+00 : f32
    %cst_16 = arith.constant 1.000000e+00 : f32
    %45 = vector.broadcast %cst_15 : f32 to vector<2x128xf32>
    %46 = arith.maximumf %45, %44 : vector<2x128xf32>
    %47 = vector.broadcast %cst_16 : f32 to vector<2x128xf32>
    %48 = arith.minimumf %47, %46 : vector<2x128xf32>
    %49 = arith.mulf %9, %48 : vector<2x128xf32>
    %cst_17 = arith.constant 5.000000e+00 : f32
    %50 = vector.broadcast %cst_17 : f32 to vector<2x128xf32>
    %51 = arith.addf %50, %42 : vector<2x128xf32>
    %cst_18 = arith.constant 6.000000e+00 : f32
    %52 = vector.broadcast %cst_18 : f32 to vector<2x128xf32>
    %53 = arith.cmpf olt, %51, %52 : vector<2x128xf32>
    %cst_19 = arith.constant 6.000000e+00 : f32
    %54 = vector.broadcast %cst_19 : f32 to vector<2x128xf32>
    %55 = arith.subf %51, %54 : vector<2x128xf32>
    %56 = arith.select %53, %51, %55 : vector<2x128xi1>, vector<2x128xf32>
    %cst_20 = arith.constant 4.000000e+00 : f32
    %57 = vector.broadcast %cst_20 : f32 to vector<2x128xf32>
    %58 = arith.subf %57, %56 : vector<2x128xf32>
    %59 = arith.minimumf %56, %58 : vector<2x128xf32>
    %cst_21 = arith.constant 0.000000e+00 : f32
    %cst_22 = arith.constant 1.000000e+00 : f32
    %60 = vector.broadcast %cst_21 : f32 to vector<2x128xf32>
    %61 = arith.maximumf %60, %59 : vector<2x128xf32>
    %62 = vector.broadcast %cst_22 : f32 to vector<2x128xf32>
    %63 = arith.minimumf %62, %61 : vector<2x128xf32>
    %64 = arith.mulf %49, %63 : vector<2x128xf32>
    %65 = arith.subf %9, %64 : vector<2x128xf32>
    %c0_23 = arith.constant 0 : index
    %c0_24 = arith.constant 0 : index
    %c0_25 = arith.constant 0 : index
    %c0_26 = arith.constant 0 : index
    %66 = vector.load %arg4[%c0_23, %c0_24, %c0_25, %c0_26] : memref<1x3x2x128xf32, #tpu.memory_space<vmem>>, vector<1x1x2x128xf32>
    %67 = vector.shape_cast %66 : vector<1x1x2x128xf32> to vector<2x128xf32>
    %68 = vector.shape_cast %65 : vector<2x128xf32> to vector<1x1x2x128xf32>
    tpu.vector_store %arg4[%c0_23, %c0_24, %c0_25, %c0_26], %68 {strides = array<i32>} : memref<1x3x2x128xf32, #tpu.memory_space<vmem>>, vector<1x1x2x128xf32>,
    %cst_27 = arith.constant 3.000000e+00 : f32
    %69 = vector.broadcast %cst_27 : f32 to vector<2x128xf32>
    %70 = arith.addf %69, %42 : vector<2x128xf32>
    %cst_28 = arith.constant 6.000000e+00 : f32
    %71 = vector.broadcast %cst_28 : f32 to vector<2x128xf32>
    %72 = arith.cmpf olt, %70, %71 : vector<2x128xf32>
    %cst_29 = arith.constant 6.000000e+00 : f32
    %73 = vector.broadcast %cst_29 : f32 to vector<2x128xf32>
    %74 = arith.subf %70, %73 : vector<2x128xf32>
    %75 = arith.select %72, %70, %74 : vector<2x128xi1>, vector<2x128xf32>
    %cst_30 = arith.constant 4.000000e+00 : f32
    %76 = vector.broadcast %cst_30 : f32 to vector<2x128xf32>
    %77 = arith.subf %76, %75 : vector<2x128xf32>
    %78 = arith.minimumf %75, %77 : vector<2x128xf32>
    %cst_31 = arith.constant 0.000000e+00 : f32
    %cst_32 = arith.constant 1.000000e+00 : f32
    %79 = vector.broadcast %cst_31 : f32 to vector<2x128xf32>
    %80 = arith.maximumf %79, %78 : vector<2x128xf32>
    %81 = vector.broadcast %cst_32 : f32 to vector<2x128xf32>
    %82 = arith.minimumf %81, %80 : vector<2x128xf32>
    %83 = arith.mulf %49, %82 : vector<2x128xf32>
    %84 = arith.subf %9, %83 : vector<2x128xf32>
    %c0_33 = arith.constant 0 : index
    %c1_34 = arith.constant 1 : index
    %c0_35 = arith.constant 0 : index
    %c0_36 = arith.constant 0 : index
    %85 = vector.load %arg4[%c0_33, %c1_34, %c0_35, %c0_36] : memref<1x3x2x128xf32, #tpu.memory_space<vmem>>, vector<1x1x2x128xf32>
    %86 = vector.shape_cast %85 : vector<1x1x2x128xf32> to vector<2x128xf32>
    %87 = vector.shape_cast %84 : vector<2x128xf32> to vector<1x1x2x128xf32>
    tpu.vector_store %arg4[%c0_33, %c1_34, %c0_35, %c0_36], %87 {strides = array<i32>} : memref<1x3x2x128xf32, #tpu.memory_space<vmem>>, vector<1x1x2x128xf32>,
    %cst_37 = arith.constant 1.000000e+00 : f32
    %88 = vector.broadcast %cst_37 : f32 to vector<2x128xf32>
    %89 = arith.addf %88, %42 : vector<2x128xf32>
    %cst_38 = arith.constant 6.000000e+00 : f32
    %90 = vector.broadcast %cst_38 : f32 to vector<2x128xf32>
    %91 = arith.cmpf olt, %89, %90 : vector<2x128xf32>
    %cst_39 = arith.constant 6.000000e+00 : f32
    %92 = vector.broadcast %cst_39 : f32 to vector<2x128xf32>
    %93 = arith.subf %89, %92 : vector<2x128xf32>
    %94 = arith.select %91, %89, %93 : vector<2x128xi1>, vector<2x128xf32>
    %cst_40 = arith.constant 4.000000e+00 : f32
    %95 = vector.broadcast %cst_40 : f32 to vector<2x128xf32>
    %96 = arith.subf %95, %94 : vector<2x128xf32>
    %97 = arith.minimumf %94, %96 : vector<2x128xf32>
    %cst_41 = arith.constant 0.000000e+00 : f32
    %cst_42 = arith.constant 1.000000e+00 : f32
    %98 = vector.broadcast %cst_41 : f32 to vector<2x128xf32>
    %99 = arith.maximumf %98, %97 : vector<2x128xf32>
    %100 = vector.broadcast %cst_42 : f32 to vector<2x128xf32>
    %101 = arith.minimumf %100, %99 : vector<2x128xf32>
    %102 = arith.mulf %49, %101 : vector<2x128xf32>
    %103 = arith.subf %9, %102 : vector<2x128xf32>
    %c0_43 = arith.constant 0 : index
    %c2_44 = arith.constant 2 : index
    %c0_45 = arith.constant 0 : index
    %c0_46 = arith.constant 0 : index
    %104 = vector.load %arg4[%c0_43, %c2_44, %c0_45, %c0_46] : memref<1x3x2x128xf32, #tpu.memory_space<vmem>>, vector<1x1x2x128xf32>
    %105 = vector.shape_cast %104 : vector<1x1x2x128xf32> to vector<2x128xf32>
    %106 = vector.shape_cast %103 : vector<2x128xf32> to vector<1x1x2x128xf32>
    tpu.vector_store %arg4[%c0_43, %c2_44, %c0_45, %c0_46], %106 {strides = array<i32>} : memref<1x3x2x128xf32, #tpu.memory_space<vmem>>, vector<1x1x2x128xf32>,
    return
  }
  func.func @transform_0(%arg0: i32, %arg1: i32, %arg2: memref<2xf32, #tpu.memory_space<smem>>) -> (i32, i32, i32, i32) {
    %c0_i32 = arith.constant 0 : i32
    %c0_i32_0 = arith.constant 0 : i32
    %c0_i32_1 = arith.constant 0 : i32
    return %arg0, %c0_i32, %arg1, %c0_i32_0 : i32, i32, i32, i32
  }
  func.func @transform_1(%arg0: i32, %arg1: i32, %arg2: memref<2xf32, #tpu.memory_space<smem>>) -> (i32, i32, i32, i32) {
    %c0_i32 = arith.constant 0 : i32
    %c0_i32_0 = arith.constant 0 : i32
    %c0_i32_1 = arith.constant 0 : i32
    return %arg0, %c0_i32, %arg1, %c0_i32_0 : i32, i32, i32, i32
  }
}

</mosaic_0001>

<llo_original>
// kernel: tpu_custom_call.1
$region0: #{tpu_custom_call.1}
  #allocation0 [shape = 'u32[]', space=smem, size = 0x4, offset = 0x4, fixed_abs, tag = 'smem constant byte address 0x4 - core index']
  #allocation1 [shape = 'u32[144,128]{1,0:T(1,128)}', space=vmem, size = 0x12000, scoped, tag = 'internal scratch']
  #allocation2 [shape = 's32[1]{0}', space=sflag, size = 0x4, scoped, tag = 'scoped memory for tpu_custom_call.1']
  #allocation3 [shape = 'u8[512]{0}', space=smem, size = 0x200, scoped, tag = 'prefetched SMEM operand 0']
  %s0 = inlined_call_operand.hbm [shape: f32[2], index: 0, kind: input, shape index: {}]
  %s1 = inlined_call_operand.hbm [shape: f32[2,3,2,128], index: 1, kind: input, shape index: {}]
  %s2 = inlined_call_operand.hbm [shape: f32[2,3,2,128], index: 2, kind: output, shape index: {}]
  %s3 = sld [smem:[#allocation0]]
  $region41: #{tpu_custom_call.1} parent=0
    _
  %s5 = ssub.s32 1, %s3
  %s6 = scalar_select 0, %s5, %s3
  %8 = dma.hbm_to_smem %s0, 16, [#allocation3], [#allocation2]
  %9 = dma.done [#allocation2], 16
  %10 = sfence
  $region1: #{tpu_custom_call.1} parent=0
    #allocation4 [shape = 'u8[6144]{0}', space=vmem, size = 0x1800, scoped, tag = 'input window, operand 1']
    #allocation5 [shape = 's32[2]{0}', space=sflag, size = 0x8, scoped, tag = 'scoped memory for tpu_custom_call.1']
    #allocation6 [shape = 's32[2]{0}', space=sflag, size = 0x8, scoped, tag = 'scoped memory for tpu_custom_call.1']
    #allocation7 [shape = 'u8[6144]{0}', space=vmem, size = 0x1800, scoped, tag = 'output window, operand 0']
    %11 = vsyncpa [#allocation5], 0
    %s12 = scalar_lea.sflag [#allocation5], 1
    %13 = vsyncpa %s12, 0
    %14 = vsyncpa [#allocation6], 0
    %s15 = scalar_lea.sflag [#allocation6], 1
    %16 = vsyncpa %s15, 0
    loop: start=0, step=1, limit=4
    $region2: #{tpu_custom_call.1} parent=1 // loop_pre_header
      _
    $region3: #{tpu_custom_call.1} parent=1 // loop_header
      %s18 = sphi 0, %s22
      %p19 = scmp.ge.s32.totalorder %s18, 4
      %s25 = sphi 0, %s37
      %s26 = sphi 0, %s33
      %s27 = sphi 0, %s25
      %s28 = sphi 0, %s26
      %s29 = sphi 0, %s27
      %s30 = sphi 0, %s28
      %s42 = sphi 0, %s44
      %s45 = sphi 0, %s42
      %s46 = sphi 0, %s45
      %s62 = sphi 0, %s46
      %s70 = sphi 0, %s72
      %s73 = sphi 0, %s70
      %s74 = sphi 0, %s73
      %s90 = sphi 0, %s74
    $region4: #{tpu_custom_call.1} parent=1 // loop_header_branch
      %21 = sbr.rel (%p19) target = $region8
    $region5: #{tpu_custom_call.1} parent=1 // loop_body
      %s23 = ssub.s32 %s18, 1
      %s24 = ssub.s32 %s18, 2
      %s31 = sadd.s32 1, %s26
      %p32 = scmp.ge.s32.totalorder %s31, 1
      %s33 = scalar_select %p32, 0, %s31
      %s34 = sadd.s32 1, %s25
      %s35 = scalar_select %p32, %s34, %s25
      %p36 = scmp.ge.s32.totalorder %s35, 2
      %s37 = scalar_select %p36, 0, %s35
      %s38 = ssub.s32 %s25, %s37
      %s39 = ssub.s32 %s26, %s33
      %s40 = sor.u32 %s38, %s39
      %p41 = scmp.eq.s32.totalorder %s40, 0
      %s43 = sadd.s32 %s42, 1
      %s44 = scalar_select %p41, %s42, %s43
      %p47 = pneg %p41
      %p48 = scmp.eq.s32.totalorder %s18, 1
      %p49 = por %p47, %p48
      %p50 = scmp.ne.s32.totalorder %s42, %s45
      %p51 = scmp.eq.s32.totalorder %s18, 0
      %p52 = por %p50, %p51
      %p53 = scmp.ne.s32.totalorder %s42, %s45
      %p54 = scmp.eq.s32.totalorder %s23, 1
      %p55 = por %p53, %p54
      %p56 = scmp.ne.s32.totalorder %s45, %s46
      %p57 = scmp.eq.s32.totalorder %s23, 0
      %p58 = por %p56, %p57
      %p59 = scmp.ne.s32.totalorder %s45, %s46
      %p60 = scmp.eq.s32.totalorder %s24, 1
      %p61 = por %p59, %p60
      %p63 = scmp.ne.s32.totalorder %s46, %s62
      %p64 = scmp.eq.s32.totalorder %s24, 0
      %p65 = por %p63, %p64
      %s66 = ssub.s32 %s25, %s37
      %s67 = ssub.s32 %s26, %s33
      %s68 = sor.u32 %s66, %s67
      %p69 = scmp.eq.s32.totalorder %s68, 0
      %s71 = sadd.s32 %s70, 1
      %s72 = scalar_select %p69, %s70, %s71
      %p75 = pneg %p69
      %p76 = scmp.eq.s32.totalorder %s18, 1
      %p77 = por %p75, %p76
      %p78 = scmp.ne.s32.totalorder %s70, %s73
      %p79 = scmp.eq.s32.totalorder %s18, 0
      %p80 = por %p78, %p79
      %p81 = scmp.ne.s32.totalorder %s70, %s73
      %p82 = scmp.eq.s32.totalorder %s23, 1
      %p83 = por %p81, %p82
      %p84 = scmp.ne.s32.totalorder %s73, %s74
      %p85 = scmp.eq.s32.totalorder %s23, 0
      %p86 = por %p84, %p85
      %p87 = scmp.ne.s32.totalorder %s73, %s74
      %p88 = scmp.eq.s32.totalorder %s24, 1
      %p89 = por %p87, %p88
      %p91 = scmp.ne.s32.totalorder %s74, %s90
      %p92 = scmp.eq.s32.totalorder %s24, 0
      %p93 = por %p91, %p92
      %p94 = scmp.le.s32.totalorder 1, %s18
      %p95 = scmp.lt.s32.totalorder %s18, 3
      %p96 = pnand %p94, %p95
      %p97 = pneg %p96
      // Predicated region
      $region9: #{tpu_custom_call.1} parent=5 // pred_check
        _
      $region10: #{tpu_custom_call.1} parent=5 // pred_check_branch
        %99 = sbr.rel (%p96) target = $region12
      $region11: #{tpu_custom_call.1} parent=5 // pred_region
        %s100 = ssub.s32 %s18, 1
      $region12: #{tpu_custom_call.1} parent=5 // pred_fallthru
        _
      %p101 = scmp.lt.s32.totalorder %s18, 2
      // Predicated region
      $region13: #{tpu_custom_call.1} parent=5 // pred_check
        %p102 = pneg %p101
      $region14: #{tpu_custom_call.1} parent=5 // pred_check_branch
        %104 = sbr.rel (%p102) target = $region16
      $region15: #{tpu_custom_call.1} parent=5 // pred_region
        // Predicated region
        $region17: #{tpu_custom_call.1} parent=15 // pred_check
          %p105 = pneg %p52
        $region18: #{tpu_custom_call.1} parent=15 // pred_check_branch
          %107 = sbr.rel (%p105) target = $region20
        $region19: #{tpu_custom_call.1} parent=15 // pred_region
          %s108 = sand.u32 %s42, 1
          %s109 = scalar_lea.sflag [#allocation5], %s108
          %s110 = sand.u32 %s42, 1
          %s111 = smul.addr %s110, 6
          %s112 = scalar_lea.vmem [#allocation4], %s111
          %s114 = ssub.s32 96, 96
          %115 = vsyncadd %s109, %s114
          %s116 = smul.addr %s25, 3
          %s117 = sadd.s32 %s26, %s116
          %s118 = smul.addr %s117, 32
          %s119 = scalar_lea.hbm %s1, %s118
          %s120 = sshll.u32 %s112, 4
          %s121 = int_to_ptr.vmem [resolvable:$true] %s120
          %126 = dma.hbm_to_vmem [thread:$0]  %s119, 96, %s121, %s109, 32, 32, 2
        $region20: #{tpu_custom_call.1} parent=15 // pred_fallthru
          _
      $region16: #{tpu_custom_call.1} parent=5 // pred_fallthru
        _
      %p127 = scmp.le.s32.totalorder 1, %s18
      %p128 = scmp.lt.s32.totalorder %s18, 3
      %p129 = pnand %p127, %p128
      %p130 = pneg %p129
      // Predicated region
      $region21: #{tpu_custom_call.1} parent=5 // pred_check
        _
      $region22: #{tpu_custom_call.1} parent=5 // pred_check_branch
        %132 = sbr.rel (%p129) target = $region24
      $region23: #{tpu_custom_call.1} parent=5 // pred_region
        %s133 = ssub.s32 %s18, 1
        %s134 = sand.u32 %s45, 1
        %s135 = scalar_lea.sflag [#allocation5], %s134
        %s136 = sand.u32 %s45, 1
        %s137 = smul.addr %s136, 6
        %s138 = scalar_lea.vmem [#allocation4], %s137
        // Predicated region
        $region25: #{tpu_custom_call.1} parent=23 // pred_check
          %p139 = pneg %p58
        $region26: #{tpu_custom_call.1} parent=23 // pred_check_branch
          %141 = sbr.rel (%p139) target = $region28
        $region27: #{tpu_custom_call.1} parent=23 // pred_region
          %142 = dma.done %s135, 96
        $region28: #{tpu_custom_call.1} parent=23 // pred_fallthru
          _
        %s143 = sand.u32 %s45, 1
        %s144 = scalar_lea.sflag [#allocation5], %s143
        %s145 = sand.u32 %s45, 1
        %s146 = smul.addr %s145, 6
        %s147 = scalar_lea.vmem [#allocation4], %s146
        %p148 = pneg %p58
        %p149 = pneg %p55
        %p150 = pneg %p86
        %p151 = pneg %p83
        %s152 = sand.u32 %s73, 1
        %s153 = scalar_lea.sflag [#allocation6], %s152
        %s154 = sand.u32 %s73, 1
        %s155 = smul.addr %s154, 6
        %s156 = scalar_lea.vmem [#allocation7], %s155
        %s157 = sld [smem:[#allocation3 + %s27]]
        %v158 = vld [vmem:[%s138] sm:$0x3]
        %s159 = scalar_lea.vmem %s138, 2 [#allocation4]
        %v160 = vld [vmem:[%s159] sm:$0x3]
        %s161 = scalar_lea.vmem %s138, 4 [#allocation4]
        %v162 = vld [vmem:[%s161] sm:$0x3]
        %v163 = vmax.f32 %v158, %v160
        %v164 = vmax.f32 %v163, %v162
        %v165 = vmin.f32 %v158, %v160
        %v166 = vmin.f32 %v165, %v162
        %v167 = vsub.f32 %v164, %v166
        %v168 = vadd.f32 %v164, 1e-06
        %v169 = vrcp.pop %v168
        %v170 = vmul.f32 %v167, %v169
        %vm171 = vcmp.eq.f32.partialorder %v167, 0.0
        %v172 = vsel %vm171, 1.0, %v167
        %v173 = vsub.f32 %v164, %v158
        %v174 = vsub.f32 %v164, %v160
        %v175 = vsub.f32 %v164, %v162
        %vm176 = vcmp.eq.f32.partialorder %v158, %v164
        %v177 = vsub.f32 %v175, %v174
        %vm178 = vcmp.eq.f32.partialorder %v160, %v164
        %v179 = vmul.f32 %v172, 2.0
        %v180 = vadd.f32 %v179, %v173
        %v181 = vsub.f32 %v180, %v175
        %v182 = vmul.f32 %v172, 4.0
        %v183 = vadd.f32 %v182, %v174
        %v184 = vsub.f32 %v183, %v173
        %v185 = vsel %vm178, %v181, %v184
        %v186 = vsel %vm176, %v177, %v185
        %v187 = vrcp.pop %v172
        %v188 = vmul.f32 %v186, %v187
        %v189 = vmul.f32 %v188, 0.16666667
        %v190 = vfloor.f32 %v189
        %v191 = vmul.f32 %v190, 6.0
        %v192 = vsub.f32 %v188, %v191
        %v193 = vstv %s157
        %v194 = vmul.f32 %v170, %v193
        %v195 = vmax.f32 %v194, 0.0
        %v196 = vmin.f32 %v195, 1.0
        %v197 = vmul.f32 %v164, %v196
        %v198 = vadd.f32 %v192, 5.0
        %vm199 = vcmp.lt.f32.partialorder %v198, 6.0
        %v200 = vsub.f32 %v198, 6.0
        %v201 = vsel %vm199, %v198, %v200
        %v202 = vsub.f32 4.0, %v201
        %v203 = vmin.f32 %v201, %v202
        %v204 = vmax.f32 %v203, 0.0
        %v205 = vmin.f32 %v204, 1.0
        %v206 = vmul.f32 %v197, %v205
        %v207 = vsub.f32 %v164, %v206
        %208 = vst [vmem:[%s156] sm:$0x3] %v207
        %v209 = vadd.f32 %v192, 3.0
        %vm210 = vcmp.lt.f32.partialorder %v209, 6.0
        %v211 = vsub.f32 %v209, 6.0
        %v212 = vsel %vm210, %v209, %v211
        %v213 = vsub.f32 4.0, %v212
        %v214 = vmin.f32 %v212, %v213
        %v215 = vmax.f32 %v214, 0.0
        %v216 = vmin.f32 %v215, 1.0
        %v217 = vmul.f32 %v197, %v216
        %v218 = vsub.f32 %v164, %v217
        %s219 = scalar_lea.vmem %s156, 2 [#allocation7]
        %220 = vst [vmem:[%s219] sm:$0x3] %v218
        %v221 = vadd.f32 %v192, 1.0
        %vm222 = vcmp.lt.f32.partialorder %v221, 6.0
        %v223 = vsub.f32 %v221, 6.0
        %v224 = vsel %vm222, %v221, %v223
        %v225 = vsub.f32 4.0, %v224
        %v226 = vmin.f32 %v224, %v225
        %v227 = vmax.f32 %v226, 0.0
        %v228 = vmin.f32 %v227, 1.0
        %v229 = vmul.f32 %v197, %v228
        %v230 = vsub.f32 %v164, %v229
        %s231 = scalar_lea.vmem %s156, 4 [#allocation7]
        %232 = vst [vmem:[%s231] sm:$0x3] %v230
        %s233 = sand.u32 %s73, 1
        %s234 = scalar_lea.sflag [#allocation6], %s233
        %s235 = sand.u32 %s73, 1
        %s236 = smul.addr %s235, 6
        %s237 = scalar_lea.vmem [#allocation7], %s236
        // Predicated region
        $region29: #{tpu_custom_call.1} parent=23 // pred_check
          %p238 = pneg %p83
        $region30: #{tpu_custom_call.1} parent=23 // pred_check_branch
          %240 = sbr.rel (%p238) target = $region32
        $region31: #{tpu_custom_call.1} parent=23 // pred_region
          %s242 = ssub.s32 96, 96
          %243 = vsyncadd %s234, %s242
          %s244 = smul.addr %s27, 3
          %s245 = sadd.s32 %s28, %s244
          %s246 = smul.addr %s245, 32
          %s247 = scalar_lea.hbm %s2, %s246
          %s248 = sshll.u32 %s237, 4
          %s249 = int_to_ptr.vmem [resolvable:$true] %s248
          %254 = dma.vmem_to_hbm [thread:$0]  %s249, 96, %s247, %s234, 32, 32, 2
        $region32: #{tpu_custom_call.1} parent=23 // pred_fallthru
          _
      $region24: #{tpu_custom_call.1} parent=5 // pred_fallthru
        _
      %p255 = scmp.le.s32.totalorder 2, %s18
      // Predicated region
      $region33: #{tpu_custom_call.1} parent=5 // pred_check
        %p256 = pneg %p255
      $region34: #{tpu_custom_call.1} parent=5 // pred_check_branch
        %258 = sbr.rel (%p256) target = $region36
      $region35: #{tpu_custom_call.1} parent=5 // pred_region
        %s259 = ssub.s32 %s18, 2
        // Predicated region
        $region37: #{tpu_custom_call.1} parent=35 // pred_check
          %p260 = pneg %p89
        $region38: #{tpu_custom_call.1} parent=35 // pred_check_branch
          %262 = sbr.rel (%p260) target = $region40
        $region39: #{tpu_custom_call.1} parent=35 // pred_region
          %s263 = sand.u32 %s74, 1
          %s264 = scalar_lea.sflag [#allocation6], %s263
          %s265 = sand.u32 %s74, 1
          %s266 = smul.addr %s265, 6
          %s267 = scalar_lea.vmem [#allocation7], %s266
          %268 = dma.done %s264, 96
        $region40: #{tpu_custom_call.1} parent=35 // pred_fallthru
          _
      $region36: #{tpu_custom_call.1} parent=5 // pred_fallthru
        _
    $region6: #{tpu_custom_call.1} parent=1 // loop_footer
      %s22 = sadd.s32 1, %s18
    $region7: #{tpu_custom_call.1} parent=1 // loop_footer_branch
      %17 = sbr.rel target = $region3
    $region8: #{tpu_custom_call.1} parent=1 // loop_exit
      _
    %269 = vsyncpa [#allocation5], 1
    %s270 = scalar_lea.sflag [#allocation5], 1
    %271 = vsyncpa %s270, 1
    %272 = vsyncpa [#allocation6], 1
    %s273 = scalar_lea.sflag [#allocation6], 1
    %274 = vsyncpa %s273, 1

</llo_original>
